<compile_context>
chip_gen: v6e
topology: v6e:2x2x1
jax: 0.10.0
libtpu: 0.0.40
codegen_flags: <defaults>
</compile_context>

<pallas_src>
import jax
import jax.numpy as jnp
from jax.experimental import pallas as pl
from jax.experimental.pallas import tpu as pltpu


def _round_up(n: int, m: int) -> int:
    return ((n + m - 1) // m) * m


def _agent_mlp_kernel(x_ref, w1_ref, b1_ref, w2_ref, b2_ref, o_ref):
    # Hot path: two MXU matmuls (bf16 operands, f32 accumulation) + bias + LeakyReLU.
    x = x_ref[...]                                        # (TB, IN)  bf16
    h = jnp.dot(x, w1_ref[...],
                preferred_element_type=jnp.float32)       # (TB, H)   f32
    h = h + b1_ref[...]                                   # broadcast (1, H) f32
    # LeakyReLU(negative_slope=0.01), in f32.
    h = jnp.where(h >= 0, h, 0.01 * h)
    # Dropout(p=0.1) -> identity in eval mode.
    y = jnp.dot(h.astype(jnp.bfloat16), w2_ref[...],
                preferred_element_type=jnp.float32)       # (TB, OUT) f32
    y = y + b2_ref[...]                                   # broadcast (1, OUT) f32
    o_ref[...] = y.astype(o_ref.dtype)


def agent_forward(x, w1, b1, w2, b2, *, max_tile=1024):
    """x: (B, IN); w1: (IN, H); b1: (1, H); w2: (H, OUT); b2: (1, OUT).

    Returns (B, OUT) float32.
    """
    B, IN = x.shape
    H = w1.shape[1]
    OUT = w2.shape[1]

    # Batch tile: big enough to amortize per-step overhead, multiple of 8 sublanes.
    TB = min(max_tile, _round_up(B, 8))
    Bp = _round_up(B, TB)
    if Bp != B:
        x = jnp.pad(x, ((0, Bp - B), (0, 0)))

    # bf16 operands for the MXU + halved DMA bytes; biases stay f32.
    x_bf16 = x.astype(jnp.bfloat16)
    w1_bf16 = w1.astype(jnp.bfloat16)
    w2_bf16 = w2.astype(jnp.bfloat16)
    b1_f32 = b1.astype(jnp.float32)
    b2_f32 = b2.astype(jnp.float32)

    grid = (Bp // TB,)

    out = pl.pallas_call(
        _agent_mlp_kernel,
        out_shape=jax.ShapeDtypeStruct((Bp, OUT), jnp.float32),
        grid_spec=pl.GridSpec(
            grid=grid,
            in_specs=[
                # x: walks the batch axis; new tile every grid step.
                pl.BlockSpec((TB, IN), lambda i: (i, 0)),
                # weights / biases: constant block index -> VMEM-resident across steps.
                pl.BlockSpec((IN, H), lambda i: (0, 0)),
                pl.BlockSpec((1, H), lambda i: (0, 0)),
                pl.BlockSpec((H, OUT), lambda i: (0, 0)),
                pl.BlockSpec((1, OUT), lambda i: (0, 0)),
            ],
            out_specs=pl.BlockSpec((TB, OUT), lambda i: (i, 0)),
        ),
        compiler_params=pltpu.CompilerParams(
            dimension_semantics=("parallel",)),
    )(x_bf16, w1_bf16, b1_f32, w2_bf16, b2_f32)

    return out[:B]


def reference_forward(x, w1, b1, w2, b2):
    h = x @ w1 + b1
    h = jnp.where(h >= 0, h, 0.01 * h)
    return h @ w2 + b2


if __name__ == "__main__":
    # Small shapes consistent with the module: batch=8, input=32, hidden=128, output=8.
    B, IN, H, OUT = 8, 32, 128, 8

    key = jax.random.PRNGKey(0)
    kx, kw1, kb1, kw2, kb2 = jax.random.split(key, 5)

    # Deterministic synthetic parameters (torch Linear-like uniform init scale).
    x = jax.random.normal(kx, (B, IN), dtype=jnp.float32)
    lim1 = 1.0 / jnp.sqrt(IN)
    w1 = jax.random.uniform(kw1, (IN, H), jnp.float32, -lim1, lim1)
    b1 = jax.random.uniform(kb1, (1, H), jnp.float32, -lim1, lim1)
    lim2 = 1.0 / jnp.sqrt(H)
    w2 = jax.random.uniform(kw2, (H, OUT), jnp.float32, -lim2, lim2)
    b2 = jax.random.uniform(kb2, (1, OUT), jnp.float32, -lim2, lim2)

    out = agent_forward(x, w1, b1, w2, b2)
    out = jax.block_until_ready(out)

    ref = reference_forward(x, w1, b1, w2, b2)
    assert out.shape == (B, OUT)
    # bf16 matmul operands (f32 accumulation) -> loosened tolerance vs f32 reference.
    assert jnp.allclose(out, ref, atol=2e-2, rtol=2e-2)

    print("KERNEL_OK")
</pallas_src>

<mosaic_0001>
module attributes {stable_mosaic.version = 11 : i64} {
  func.func @_agent_mlp_kernel(%arg0: i32, %arg1: memref<8x32xbf16, #tpu.memory_space<vmem>>, %arg2: memref<32x128xbf16, #tpu.memory_space<vmem>>, %arg3: memref<1x128xf32, #tpu.memory_space<vmem>>, %arg4: memref<128x8xbf16, #tpu.memory_space<vmem>>, %arg5: memref<1x8xf32, #tpu.memory_space<vmem>>, %arg6: memref<8x8xf32, #tpu.memory_space<vmem>>) attributes {dimension_semantics = [#tpu.dimension_semantics<parallel>], iteration_bounds = array<i64: 1>, scalar_prefetch = 0 : i64, scratch_operands = 0 : i64, tpu.core_type = #tpu.core_type<tc>, window_params = [{transform_indices = @transform_0, window_bounds = array<i64: 8, 32>}, {pipeline_mode = #tpu.pipeline_mode<synchronous>, transform_indices = @transform_1, window_bounds = array<i64: 32, 128>}, {pipeline_mode = #tpu.pipeline_mode<synchronous>, transform_indices = @transform_2, window_bounds = array<i64: 1, 128>}, {pipeline_mode = #tpu.pipeline_mode<synchronous>, transform_indices = @transform_3, window_bounds = array<i64: 128, 8>}, {pipeline_mode = #tpu.pipeline_mode<synchronous>, transform_indices = @transform_4, window_bounds = array<i64: 1, 8>}, {transform_indices = @transform_5, window_bounds = array<i64: 8, 8>}]} {
    %c0 = arith.constant 0 : index
    %c0_0 = arith.constant 0 : index
    %0 = vector.load %arg1[%c0, %c0_0] : memref<8x32xbf16, #tpu.memory_space<vmem>>, vector<8x32xbf16>
    %c0_1 = arith.constant 0 : index
    %c0_2 = arith.constant 0 : index
    %1 = vector.load %arg2[%c0_1, %c0_2] : memref<32x128xbf16, #tpu.memory_space<vmem>>, vector<32x128xbf16>
    %cst = arith.constant dense<0.000000e+00> : vector<8x128xf32>
    %2 = tpu.matmul %0, %1, %cst {dimension_numbers = #tpu.dot_dimension_numbers<[1], [0], [0], [1], [0, 0, 1, 1], [], []>} : vector<8x32xbf16>, vector<32x128xbf16>, vector<8x128xf32> -> vector<8x128xf32>
    %c0_3 = arith.constant 0 : index
    %c0_4 = arith.constant 0 : index
    %3 = vector.load %arg3[%c0_3, %c0_4] : memref<1x128xf32, #tpu.memory_space<vmem>>, vector<1x128xf32>
    %4 = vector.broadcast %3 : vector<1x128xf32> to vector<8x128xf32>
    %5 = arith.addf %2, %4 : vector<8x128xf32>
    %cst_5 = arith.constant 0.000000e+00 : f32
    %6 = vector.broadcast %cst_5 : f32 to vector<8x128xf32>
    %7 = arith.cmpf oge, %5, %6 : vector<8x128xf32>
    %cst_6 = arith.constant 0.00999999977 : f32
    %8 = vector.broadcast %cst_6 : f32 to vector<8x128xf32>
    %9 = arith.mulf %8, %5 : vector<8x128xf32>
    %10 = arith.select %7, %5, %9 : vector<8x128xi1>, vector<8x128xf32>
    %11 = arith.truncf %10 : vector<8x128xf32> to vector<8x128xbf16>
    %c0_7 = arith.constant 0 : index
    %c0_8 = arith.constant 0 : index
    %12 = vector.load %arg4[%c0_7, %c0_8] : memref<128x8xbf16, #tpu.memory_space<vmem>>, vector<128x8xbf16>
    %cst_9 = arith.constant dense<0.000000e+00> : vector<8x8xf32>
    %13 = tpu.matmul %11, %12, %cst_9 {dimension_numbers = #tpu.dot_dimension_numbers<[1], [0], [0], [1], [0, 0, 1, 1], [], []>} : vector<8x128xbf16>, vector<128x8xbf16>, vector<8x8xf32> -> vector<8x8xf32>
    %c0_10 = arith.constant 0 : index
    %c0_11 = arith.constant 0 : index
    %14 = vector.load %arg5[%c0_10, %c0_11] : memref<1x8xf32, #tpu.memory_space<vmem>>, vector<1x8xf32>
    %15 = vector.broadcast %14 : vector<1x8xf32> to vector<8x8xf32>
    %16 = arith.addf %13, %15 : vector<8x8xf32>
    %c0_12 = arith.constant 0 : index
    %c0_13 = arith.constant 0 : index
    %17 = vector.load %arg6[%c0_12, %c0_13] : memref<8x8xf32, #tpu.memory_space<vmem>>, vector<8x8xf32>
    tpu.vector_store %arg6[%c0_12, %c0_13], %16 {strides = array<i32>} : memref<8x8xf32, #tpu.memory_space<vmem>>, vector<8x8xf32>,
    return
  }
  func.func @transform_0(%arg0: i32) -> (i32, i32) {
    %c0_i32 = arith.constant 0 : i32
    %c0_i32_0 = arith.constant 0 : i32
    return %arg0, %c0_i32 : i32, i32
  }
  func.func @transform_1(%arg0: i32) -> (i32, i32) {
    %c0_i32 = arith.constant 0 : i32
    %c0_i32_0 = arith.constant 0 : i32
    %c0_i32_1 = arith.constant 0 : i32
    return %c0_i32, %c0_i32_0 : i32, i32
  }
  func.func @transform_2(%arg0: i32) -> (i32, i32) {
    %c0_i32 = arith.constant 0 : i32
    %c0_i32_0 = arith.constant 0 : i32
    %c0_i32_1 = arith.constant 0 : i32
    return %c0_i32, %c0_i32_0 : i32, i32
  }
  func.func @transform_3(%arg0: i32) -> (i32, i32) {
    %c0_i32 = arith.constant 0 : i32
    %c0_i32_0 = arith.constant 0 : i32
    %c0_i32_1 = arith.constant 0 : i32
    return %c0_i32, %c0_i32_0 : i32, i32
  }
  func.func @transform_4(%arg0: i32) -> (i32, i32) {
    %c0_i32 = arith.constant 0 : i32
    %c0_i32_0 = arith.constant 0 : i32
    %c0_i32_1 = arith.constant 0 : i32
    return %c0_i32, %c0_i32_0 : i32, i32
  }
  func.func @transform_5(%arg0: i32) -> (i32, i32) {
    %c0_i32 = arith.constant 0 : i32
    %c0_i32_0 = arith.constant 0 : i32
    return %arg0, %c0_i32 : i32, i32
  }
}

</mosaic_0001>

<llo_original>
// kernel: tpu_custom_call.1
$region0: #{tpu_custom_call.1}
  #allocation0 [shape = 'u32[]', space=smem, size = 0x4, offset = 0x4, fixed_abs, tag = 'smem constant byte address 0x4 - core index']
  #allocation1 [shape = 'u32[144,128]{1,0:T(1,128)}', space=vmem, size = 0x12000, scoped, tag = 'internal scratch']
  %s0 = inlined_call_operand.vmem [shape: bf16[8,32], index: 0, kind: input, shape index: {}]
  %s1 = inlined_call_operand.vmem [shape: bf16[32,128], index: 1, kind: input, shape index: {}]
  %s2 = inlined_call_operand.vmem [shape: f32[1,128], index: 2, kind: input, shape index: {}]
  %s3 = inlined_call_operand.vmem [shape: bf16[128,8], index: 3, kind: input, shape index: {}]
  %s4 = inlined_call_operand.vmem [shape: f32[1,8], index: 4, kind: input, shape index: {}]
  %s5 = inlined_call_operand.hbm [shape: f32[8,8], index: 5, kind: output, shape index: {}]
  %s6 = sld [smem:[#allocation0]]
  $region30: #{tpu_custom_call.1} parent=0
    _
  %s8 = ssub.s32 1, %s6
  %s9 = scalar_select 0, %s8, %s6
  $region1: #{tpu_custom_call.1} parent=0
    #allocation2 [shape = 'u8[4096]{0}', space=vmem, size = 0x1000, scoped, tag = 'output window, operand 0, single buffered']
    #allocation3 [shape = 's32[1]{0}', space=sflag, size = 0x4, scoped, tag = 'scoped memory for tpu_custom_call.1']
    %10 = vsyncpa [#allocation3], 0
    // Predicated region
    $region2: #{tpu_custom_call.1} parent=1 // pred_check
      _
    $region3: #{tpu_custom_call.1} parent=1 // pred_check_branch
      %12 = sbr.rel (0) target = $region5
    $region4: #{tpu_custom_call.1} parent=1 // pred_region
      _
    $region5: #{tpu_custom_call.1} parent=1 // pred_fallthru
      _
    // Predicated region
    $region6: #{tpu_custom_call.1} parent=1 // pred_check
      _
    $region7: #{tpu_custom_call.1} parent=1 // pred_check_branch
      %14 = sbr.rel (0) target = $region9
    $region8: #{tpu_custom_call.1} parent=1 // pred_region
      _
    $region9: #{tpu_custom_call.1} parent=1 // pred_fallthru
      _
    // Predicated region
    $region10: #{tpu_custom_call.1} parent=1 // pred_check
      _
    $region11: #{tpu_custom_call.1} parent=1 // pred_check_branch
      %16 = sbr.rel (0) target = $region13
    $region12: #{tpu_custom_call.1} parent=1 // pred_region
      _
    $region13: #{tpu_custom_call.1} parent=1 // pred_fallthru
      _
    // Predicated region
    $region14: #{tpu_custom_call.1} parent=1 // pred_check
      _
    $region15: #{tpu_custom_call.1} parent=1 // pred_check_branch
      %18 = sbr.rel (0) target = $region17
    $region16: #{tpu_custom_call.1} parent=1 // pred_region
      _
    $region17: #{tpu_custom_call.1} parent=1 // pred_fallthru
      _
    // Predicated region
    $region18: #{tpu_custom_call.1} parent=1 // pred_check
      _
    $region19: #{tpu_custom_call.1} parent=1 // pred_check_branch
      %20 = sbr.rel (0) target = $region21
    $region20: #{tpu_custom_call.1} parent=1 // pred_region
      _
    $region21: #{tpu_custom_call.1} parent=1 // pred_fallthru
      _
    %v22 = vld [vmem:[%s0] sm:$0xf]
    %v23 = vld [vmem:[%s1] sm:$0xf]
    %v24 = vld [vmem:[%s1 + $0x4] sm:$0xf]
    %v25 = vld [vmem:[%s1 + $0x8] sm:$0xf]
    %v26 = vld [vmem:[%s1 + $0xc] sm:$0xf]
    %v27 = vld [vmem:[%s2] sm:$0x1]
    %v29 = vlaneseq
    %v30 = vshrl.u32 %v29, 7
    %v31 = vsub.s32 0, %v30
    %v32 = vrot.slane %v27, %v31
    %v38 = vunpack.c.l.b16 %v23
    %v39 = vunpack.c.l.b16 %v24
    %v40 = vunpack.c.l.b16 %v25
    %v41 = vunpack.c.l.b16 %v26
    %v42 = vpack.c.b16 %v39, %v38
    %v43 = vpack.c.b16 %v41, %v40
    %vm46 = vcmask 261120
    %v48 = vsel %vm46, %v22, 0
    %50 = vmatprep.subr.bf16.mxu0 0
    %51 = vmatpush1.bf16.msra.mxu0 0
    %52 = vmatprep.subr.bf16.mxu0 0
    %53 = vmatpush1.bf16.msra.mxu0 0
    %54 = vmatprep.subr.bf16.mxu0 0
    %55 = vmatpush1.bf16.msra.mxu0 0
    %56 = vmatprep.subr.bf16.mxu0 0
    %57 = vmatpush1.bf16.msra.mxu0 0
    %58 = vmatprep.subr.bf16.mxu0 0
    %59 = vmatpush1.bf16.msra.mxu0 0
    %60 = vmatprep.subr.bf16.mxu0 0
    %61 = vmatpush1.bf16.msra.mxu0 0
    %62 = vmatprep.subr.bf16.mxu0 0
    %63 = vmatpush1.bf16.msra.mxu0 %v43
    %64 = vmatprep.subr.bf16.mxu0 0
    %65 = vmatpush1.bf16.msra.mxu0 %v42
    %66 = vmatprep.subr.bf16.mxu0 0
    %67 = vmatpush2.bf16.msra.mxu0 0
    %68 = vmatprep.subr.bf16.mxu0 0
    %69 = vmatpush2.bf16.msra.mxu0 0
    %70 = vmatprep.subr.bf16.mxu0 0
    %71 = vmatpush2.bf16.msra.mxu0 0
    %72 = vmatprep.subr.bf16.mxu0 0
    %73 = vmatpush2.bf16.msra.mxu0 0
    %74 = vmatprep.subr.bf16.mxu0 0
    %75 = vmatpush2.bf16.msra.mxu0 0
    %76 = vmatprep.subr.bf16.mxu0 0
    %77 = vmatpush2.bf16.msra.mxu0 0
    %78 = vmatprep.subr.bf16.mxu0 0
    %79 = vmatpush2.bf16.msra.mxu0 0
    %80 = vmatprep.subr.bf16.mxu0 0
    %81 = vmatpush2.bf16.msra.mxu0 0
    %82 = vmatprep.mubr.bf16.mxu0 0
    %83 = vmatmul.mubr.bf16.gmra.mxu0 %v48
    %v84 = vpop.f32.mrf.mxu0
    %v85 = vadd.f32 %v32, %v84
    %v86 = vpop.f32.mrf.mxu0
    %v87 = vpop.f32.mrf.mxu0
    %v88 = vpop.f32.mrf.mxu0
    %89 = vdwg.mxu0
    %vm90 = vcmp.ge.f32.partialorder %v85, 0.0
    %v91 = vmul.f32 %v85, 0.01
    %v92 = vsel %vm90, %v85, %v91
    %v93 = vpack.c.bf16 %v92, %v92
    %v94 = vld [vmem:[%s3] sm:$0xf]
    %v95 = vld [vmem:[%s3 + $0x4] sm:$0xf]
    %v96 = vld [vmem:[%s3 + $0x8] sm:$0xf]
    %v97 = vld [vmem:[%s3 + $0xc] sm:$0xf]
    %v98 = vld [vmem:[%s3 + $0x10] sm:$0xf]
    %v99 = vld [vmem:[%s3 + $0x14] sm:$0xf]
    %v100 = vld [vmem:[%s3 + $0x18] sm:$0xf]
    %v101 = vld [vmem:[%s3 + $0x1c] sm:$0xf]
    %v102 = vld [vmem:[%s3 + $0x20] sm:$0xf]
    %v103 = vld [vmem:[%s3 + $0x24] sm:$0xf]
    %v104 = vld [vmem:[%s3 + $0x28] sm:$0xf]
    %v105 = vld [vmem:[%s3 + $0x2c] sm:$0xf]
    %v106 = vld [vmem:[%s3 + $0x30] sm:$0xf]
    %v107 = vld [vmem:[%s3 + $0x34] sm:$0xf]
    %v108 = vld [vmem:[%s3 + $0x38] sm:$0xf]
    %v109 = vld [vmem:[%s3 + $0x3c] sm:$0xf]
    %v110 = vld [vmem:[%s4] sm:$0x1]
    %v112 = vlaneseq
    %v113 = vshrl.u32 %v112, 7
    %v114 = vsub.s32 0, %v113
    %v115 = vrot.slane %v110, %v114
    %v133 = vunpack.c.l.b16 %v94
    %v134 = vunpack.c.l.b16 %v95
    %v135 = vunpack.c.l.b16 %v96
    %v136 = vunpack.c.l.b16 %v97
    %v137 = vunpack.c.l.b16 %v98
    %v138 = vunpack.c.l.b16 %v99
    %v139 = vunpack.c.l.b16 %v100
    %v140 = vunpack.c.l.b16 %v101
    %v141 = vunpack.c.l.b16 %v102
    %v142 = vunpack.c.l.b16 %v103
    %v143 = vunpack.c.l.b16 %v104
    %v144 = vunpack.c.l.b16 %v105
    %v145 = vunpack.c.l.b16 %v106
    %v146 = vunpack.c.l.b16 %v107
    %v147 = vunpack.c.l.b16 %v108
    %v148 = vunpack.c.l.b16 %v109
    %v149 = vpack.c.b16 %v134, %v133
    %v150 = vpack.c.b16 %v136, %v135
    %v151 = vpack.c.b16 %v138, %v137
    %v152 = vpack.c.b16 %v140, %v139
    %v153 = vpack.c.b16 %v142, %v141
    %v154 = vpack.c.b16 %v144, %v143
    %v155 = vpack.c.b16 %v146, %v145
    %v156 = vpack.c.b16 %v148, %v147
    %165 = vmatprep.subr.bf16.mxu0 0
    %166 = vmatpush1.bf16.msra.mxu0 %v156
    %167 = vmatprep.subr.bf16.mxu0 0
    %168 = vmatpush1.bf16.msra.mxu0 %v155
    %169 = vmatprep.subr.bf16.mxu0 0
    %170 = vmatpush1.bf16.msra.mxu0 %v154
    %171 = vmatprep.subr.bf16.mxu0 0
    %172 = vmatpush1.bf16.msra.mxu0 %v153
    %173 = vmatprep.subr.bf16.mxu0 0
    %174 = vmatpush1.bf16.msra.mxu0 %v152
    %175 = vmatprep.subr.bf16.mxu0 0
    %176 = vmatpush1.bf16.msra.mxu0 %v151
    %177 = vmatprep.subr.bf16.mxu0 0
    %178 = vmatpush1.bf16.msra.mxu0 %v150
    %179 = vmatprep.subr.bf16.mxu0 0
    %180 = vmatpush1.bf16.msra.mxu0 %v149
    %181 = vmatprep.subr.bf16.mxu0 0
    %182 = vmatpush2.bf16.msra.mxu0 0
    %183 = vmatprep.subr.bf16.mxu0 0
    %184 = vmatpush2.bf16.msra.mxu0 0
    %185 = vmatprep.subr.bf16.mxu0 0
    %186 = vmatpush2.bf16.msra.mxu0 0
    %187 = vmatprep.subr.bf16.mxu0 0
    %188 = vmatpush2.bf16.msra.mxu0 0
    %189 = vmatprep.subr.bf16.mxu0 0
    %190 = vmatpush2.bf16.msra.mxu0 0
    %191 = vmatprep.subr.bf16.mxu0 0
    %192 = vmatpush2.bf16.msra.mxu0 0
    %193 = vmatprep.subr.bf16.mxu0 0
    %194 = vmatpush2.bf16.msra.mxu0 0
    %195 = vmatprep.subr.bf16.mxu0 0
    %196 = vmatpush2.bf16.msra.mxu0 0
    %197 = vmatprep.mubr.bf16.mxu0 0
    %198 = vmatmul.mubr.bf16.gmra.mxu0 %v93
    %v199 = vpop.f32.mrf.mxu0
    %v200 = vadd.f32 %v115, %v199
    %v201 = vpop.f32.mrf.mxu0
    %v202 = vpop.f32.mrf.mxu0
    %v203 = vpop.f32.mrf.mxu0
    %204 = vdwg.mxu0
    %vm205 = vcmask 64512
    %206 = vst.msk [vmem:[#allocation2] sm:$0xff] %vm205, %v200
    // Predicated region
    $region22: #{tpu_custom_call.1} parent=1 // pred_check
      _
    $region23: #{tpu_custom_call.1} parent=1 // pred_check_branch
      %208 = sbr.rel (0) target = $region25
    $region24: #{tpu_custom_call.1} parent=1 // pred_region
      %s210 = ssub.s32 128, 128
      %211 = vsyncadd [#allocation3], %s210
      %s213 = sshll.u32 [#allocation2], 4
      %s214 = int_to_ptr.vmem [resolvable:$true] %s213
      %216 = dma.vmem_to_hbm [thread:$0]  %s214, 128, %s5, [#allocation3]
    $region25: #{tpu_custom_call.1} parent=1 // pred_fallthru
      _
    // Predicated region
    $region26: #{tpu_custom_call.1} parent=1 // pred_check
      _
    $region27: #{tpu_custom_call.1} parent=1 // pred_check_branch
      %218 = sbr.rel (0) target = $region29
    $region28: #{tpu_custom_call.1} parent=1 // pred_region
      %219 = dma.done [#allocation3], 128
    $region29: #{tpu_custom_call.1} parent=1 // pred_fallthru
      _
    %220 = vsyncpa [#allocation3], 1

</llo_original>
